<compile_context>
chip_gen: v7x
topology: tpu7x:2x2x1
jax: 0.10.0
libtpu: 0.0.40
codegen_flags: <defaults>
</compile_context>

<pallas_src>
import functools

import numpy as np
import jax
import jax.numpy as jnp
from jax.experimental import pallas as pl
from jax.experimental.pallas import tpu as pltpu


# --------------------------------------------------------------------------
# Phase 1 kernel: out[8, tn] block accumulated over the contraction axis k.
#   out = Mt_e @ ent + Mt_c @ con   (ent/con symmetric, so this equals the
#   column-oriented reductions of the reference).
# Mt_e / Mt_c are VMEM-resident [8, N]; the k-chunk is sliced in-kernel.
# --------------------------------------------------------------------------
def _phase1_kernel(tk, mte_ref, mtc_ref, ent_ref, con_ref, out_ref):
    k = pl.program_id(1)

    @pl.when(k == 0)
    def _():
        out_ref[...] = jnp.zeros_like(out_ref)

    koff = pl.multiple_of(k * tk, tk)            # aligned lane slice into the LHS
    mte = mte_ref[:, pl.ds(koff, tk)]
    mtc = mtc_ref[:, pl.ds(koff, tk)]
    out_ref[...] += (
        jnp.dot(mte, ent_ref[...], preferred_element_type=jnp.float32)
        + jnp.dot(mtc, con_ref[...], preferred_element_type=jnp.float32))


# --------------------------------------------------------------------------
# Phase 2 kernel: seed-propagation normalization + multi-hop loop (rank-1
# rewrite of the unlabeled<->unlabeled pair mask) + per-class mean + global
# min.  Everything is [1, N] row vectors (lane-dense), num_steps is static.
# --------------------------------------------------------------------------
def _hop_kernel(num_steps, pt_ref, l1_ref, l2_ref, u_ref, valid_ref, out_ref):
    n_lanes = pt_ref.shape[1]
    raw1 = pt_ref[0:1, :]          # seed-prop numerator, class 1
    raw2 = pt_ref[1:2, :]          # seed-prop numerator, class 2
    edge_raw = pt_ref[2:3, :]      # sum over unlabeled others of (ent + con)
    l1 = l1_ref[...]
    l2 = l2_ref[...]
    u = u_ref[...]
    valid = valid_ref[...]

    cnt0 = jnp.sum(l1 + l2)        # labeled nodes with non-zero stance
    num_unlab = jnp.sum(u)         # number of (real) unlabeled nodes

    # ---- step 0: unlabeled <- labeled seed propagation -------------------
    inv_den0 = 1.0 / jnp.where(u > 0, cnt0, 1.0)
    s1 = raw1 * u * inv_den0
    s2 = raw2 * u * inv_den0
    acc1 = s1
    acc2 = s2

    # ---- multi-hop steps (rank-1 pair mask; class-1 == class-2 update) ---
    edge = u * edge_raw                                         # loop-invariant
    inv_denh = 1.0 / jnp.where(u > 0, 2.0 * (num_unlab - 1.0), 1.0)

    ssum = s1 + s2                 # masked (zero on labeled / padded rows)
    for _ in range(num_steps):     # static, short -> unrolled
        tot = jnp.sum(ssum)
        s = u * (tot - ssum + edge) * inv_denh
        acc1 = acc1 + s
        acc2 = acc2 + s
        ssum = 2.0 * s

    inv_t = jnp.float32(1.0 / (num_steps + 1))
    mean1 = acc1 * inv_t           # class-0 mean is always 0 in the reference
    mean2 = acc2 * inv_t
    # nls[:, 0] = nls[:, 1:].min() over REAL rows only (padded rows masked out)
    gmin = jnp.min(jnp.where(valid > 0, jnp.minimum(mean1, mean2), jnp.inf))

    row = jax.lax.broadcasted_iota(jnp.int32, (out_ref.shape[0], n_lanes), 0)
    out_ref[...] = jnp.where(row == 0, gmin,
                             jnp.where(row == 1, mean1,
                                       jnp.where(row == 2, mean2, 0.0)))


def _choose_tiling(n):
    """Pick (n_pad, tn, tk): large blocks (>=1-4 MiB of bf16 per grid step) to
    amortize per-step pipeline overhead, while double-buffered inputs stay well
    under v7x's 64 MiB VMEM, and the column axis keeps >=2 blocks on large
    graphs so the 'parallel' dimension can split across both TensorCores."""
    n128 = max(128, ((n + 127) // 128) * 128)
    if n128 <= 512:
        return n128, n128, n128                  # whole problem in one grid step
    tn = 512                                     # output-column tile
    n_pad = -(-n128 // tn) * tn                  # round n up to the tile (no 128 fallback)
    for tk in (2048, 1024, 512):                 # contraction tile (largest dividing n_pad)
        if n_pad % tk == 0:
            return n_pad, tn, tk
    return n_pad, tn, 512


def multi_hop_consistency_scoring(adj_list, node_labels, num_steps=1, num_classes=3):
    assert num_classes == 3, "flip_tm_stance semantics require 3 classes"
    assert len(node_labels) > 0

    # ---- glue (plain python / numpy): adjacency list -> dense tensors ----
    node_idx = {}
    labeled, unlabeled = [], []
    edges = []
    for t_id, p_id, (ew, cw) in adj_list:
        for nid in (t_id, p_id):
            if nid not in node_idx:
                node_idx[nid] = len(node_idx)
                (labeled if nid in node_labels else unlabeled).append(nid)
        edges.append((t_id, p_id, -float(ew), -float(cw)))   # negated, as in initialize()

    n = len(node_idx)
    n_pad, tn, tk = _choose_tiling(n)

    ent = np.zeros((n_pad, n_pad), np.float32)
    con = np.zeros((n_pad, n_pad), np.float32)
    for t_id, p_id, ew, cw in edges:
        i, j = node_idx[t_id], node_idx[p_id]
        ent[i, j] = ent[j, i] = ew
        con[i, j] = con[j, i] = cw

    l1 = np.zeros((1, n_pad), np.float32)
    l2 = np.zeros((1, n_pad), np.float32)
    u = np.zeros((1, n_pad), np.float32)
    valid = np.zeros((1, n_pad), np.float32)
    valid[0, :n] = 1.0
    for nid in labeled:
        lab = int(node_labels[nid])
        if lab == 1:
            l1[0, node_idx[nid]] = 1.0
        elif lab == 2:
            l2[0, node_idx[nid]] = 1.0
    for nid in unlabeled:
        u[0, node_idx[nid]] = 1.0

    # Stacked 0/1 mask LHS for the MXU matmuls (8 sublanes, rows 3..7 unused).
    # Exactly representable in bf16.
    mte = np.zeros((8, n_pad), np.float32)
    mtc = np.zeros((8, n_pad), np.float32)
    mte[0], mte[1], mte[2] = l1[0], l2[0], u[0]
    mtc[0], mtc[1], mtc[2] = l2[0], l1[0], u[0]

    steps = 0 if len(unlabeled) == 1 else num_steps

    grid = (n_pad // tn, n_pad // tk)   # (output-column blocks, contraction blocks)

    ent_bf = jnp.asarray(ent, dtype=jnp.bfloat16)   # halves HBM traffic of the O(N^2) read
    con_bf = jnp.asarray(con, dtype=jnp.bfloat16)
    mte_bf = jnp.asarray(mte, dtype=jnp.bfloat16)
    mtc_bf = jnp.asarray(mtc, dtype=jnp.bfloat16)

    # ---- phase 1: O(N^2) reductions on the MXU, tiled & pipelined ---------
    pt = pl.pallas_call(
        functools.partial(_phase1_kernel, tk),
        out_shape=jax.ShapeDtypeStruct((8, n_pad), jnp.float32),
        grid_spec=pltpu.PrefetchScalarGridSpec(
            num_scalar_prefetch=0,
            grid=grid,
            in_specs=[
                pl.BlockSpec((8, n_pad), lambda j, k: (0, 0)),   # Mt_e (VMEM-resident)
                pl.BlockSpec((8, n_pad), lambda j, k: (0, 0)),   # Mt_c (VMEM-resident)
                pl.BlockSpec((tk, tn), lambda j, k: (k, j)),     # ent block
                pl.BlockSpec((tk, tn), lambda j, k: (k, j)),     # con block
            ],
            out_specs=pl.BlockSpec((8, tn), lambda j, k: (0, j)),
        ),
        compiler_params=pltpu.CompilerParams(
            dimension_semantics=("parallel", "arbitrary"),
            vmem_limit_bytes=48 * 1024 * 1024),
    )(mte_bf, mtc_bf, ent_bf, con_bf)

    # ---- phase 2: O(N)-per-hop propagation / normalization / min ----------
    out_wide = pl.pallas_call(
        functools.partial(_hop_kernel, steps),
        out_shape=jax.ShapeDtypeStruct((8, n_pad), jnp.float32),
        in_specs=[pl.BlockSpec(memory_space=pltpu.MemorySpace.VMEM)] * 5,
        out_specs=pl.BlockSpec(memory_space=pltpu.MemorySpace.VMEM),
    )(pt, jnp.asarray(l1), jnp.asarray(l2), jnp.asarray(u), jnp.asarray(valid))

    # rows 0/1/2 = [global min, class-1 mean, class-2 mean] -> [n, 3]
    scores = out_wide[:3, :n].T
    return scores, node_idx


def _reference(adj_list, node_labels, num_steps=1, num_classes=3):
    """Pure-numpy transcription of the PyTorch forward() for verification."""
    flip = {0: 0, 1: 2, 2: 1}
    node_idx, labeled, unlabeled, edge = {}, [], [], {}
    for t_id, p_id, (ew, cw) in adj_list:
        for nid in (t_id, p_id):
            if nid not in node_idx:
                node_idx[nid] = len(node_idx)
                (labeled if nid in node_labels else unlabeled).append(nid)
        edge[(t_id, p_id)] = edge[(p_id, t_id)] = (-float(ew), -float(cw))
    steps = 0 if len(unlabeled) == 1 else num_steps
    n = len(node_idx)
    nls = np.zeros((n, num_classes, steps + 1), np.float32)
    nlc = np.zeros((n, num_classes, steps + 1), np.float32)
    nlc[:, 0, :] = 1.0
    for nid in labeled:
        nlc[node_idx[nid], :, :] = 1.0
    for node in unlabeled:
        for other in labeled:
            ol = int(node_labels[other])
            if ol == 0:
                continue
            ew, cw = edge[(node, other)]
            i = node_idx[node]
            nls[i, ol, 0] += ew;        nlc[i, ol, 0] += 1
            nls[i, flip[ol], 0] += cw;  nlc[i, flip[ol], 0] += 1
    nls[:, :, 0] = nls[:, :, 0] / nlc[:, :, 0]
    for s in range(1, steps + 1):
        for node in unlabeled:
            for other in unlabeled:
                if node == other:
                    continue
                ew, cw = edge[(node, other)]
                i, o = node_idx[node], node_idx[other]
                for op in (1, 2):
                    ns = nls[o, op, s - 1]
                    nls[i, op, s] += ns + ew;        nlc[i, op, s] += 1
                    nls[i, flip[op], s] += ns + cw;  nlc[i, flip[op], s] += 1
        nls[:, :, s] = nls[:, :, s] / nlc[:, :, s]
    nls = nls.mean(axis=-1)
    nls[:, 0] = nls[:, 1:].min()
    return nls, node_idx


if __name__ == "__main__":
    # Small deterministic example: 8 nodes, complete graph, 3 seed-labeled nodes.
    n_nodes = 8
    pairs = [(a, b) for a in range(n_nodes) for b in range(a + 1, n_nodes)]
    key = jax.random.PRNGKey(0)
    w = np.asarray(jax.random.uniform(key, (len(pairs), 2),
                                      minval=0.1, maxval=1.0, dtype=jnp.float32))
    adj_list = [(f"n{a}", f"n{b}", (float(w[k, 0]), float(w[k, 1])))
                for k, (a, b) in enumerate(pairs)]
    node_labels = {"n0": 1, "n1": 2, "n2": 0}

    out, node_idx = multi_hop_consistency_scoring(adj_list, node_labels,
                                                  num_steps=2, num_classes=3)
    out = jax.block_until_ready(out)

    ref, ref_idx = _reference(adj_list, node_labels, num_steps=2, num_classes=3)
    assert ref_idx == node_idx
    # bf16 edge-weight storage -> ~1e-3 relative error vs the f32 reference.
    np.testing.assert_allclose(np.asarray(out), ref, rtol=2e-2, atol=2e-3)
    print("KERNEL_OK")
</pallas_src>

<mosaic_0001>
module attributes {stable_mosaic.version = 11 : i64} {
  func.func @_phase1_kernel(%arg0: i32, %arg1: i32, %arg2: memref<8x128xbf16, #tpu.memory_space<vmem>>, %arg3: memref<8x128xbf16, #tpu.memory_space<vmem>>, %arg4: memref<128x128xbf16, #tpu.memory_space<vmem>>, %arg5: memref<128x128xbf16, #tpu.memory_space<vmem>>, %arg6: memref<8x128xf32, #tpu.memory_space<vmem>>) attributes {dimension_semantics = [#tpu.dimension_semantics<parallel>, #tpu.dimension_semantics<arbitrary>], iteration_bounds = array<i64: 1, 1>, scalar_prefetch = 0 : i64, scratch_operands = 0 : i64, tpu.core_type = #tpu.core_type<tc>, window_params = [{pipeline_mode = #tpu.pipeline_mode<synchronous>, transform_indices = @transform_0, window_bounds = array<i64: 8, 128>}, {pipeline_mode = #tpu.pipeline_mode<synchronous>, transform_indices = @transform_1, window_bounds = array<i64: 8, 128>}, {transform_indices = @transform_2, window_bounds = array<i64: 128, 128>}, {transform_indices = @transform_3, window_bounds = array<i64: 128, 128>}, {transform_indices = @transform_4, window_bounds = array<i64: 8, 128>}]} {
    %c0_i32 = arith.constant 0 : i32
    %0 = arith.cmpi eq, %arg1, %c0_i32 : i32
    %1 = arith.extui %0 : i1 to i32
    %c0_i32_0 = arith.constant 0 : i32
    %2 = arith.cmpi ne, %1, %c0_i32_0 : i32
    scf.if %2 {
      %cst_11 = arith.constant 0.000000e+00 : f32
      %17 = vector.broadcast %cst_11 : f32 to vector<8x128xf32>
      %c0_12 = arith.constant 0 : index
      %c0_13 = arith.constant 0 : index
      %18 = vector.load %arg6[%c0_12, %c0_13] : memref<8x128xf32, #tpu.memory_space<vmem>>, vector<8x128xf32>
      tpu.vector_store %arg6[%c0_12, %c0_13], %17 {strides = array<i32>} : memref<8x128xf32, #tpu.memory_space<vmem>>, vector<8x128xf32>,
    } else {
    }
    %c128_i32 = arith.constant 128 : i32
    %3 = arith.muli %arg1, %c128_i32 : i32
    %4 = tpu.assume_multiple %3, 128 : i32
    %c0 = arith.constant 0 : index
    %5 = arith.index_cast %4 : i32 to index
    %6 = vector.load %arg2[%c0, %5] : memref<8x128xbf16, #tpu.memory_space<vmem>>, vector<8x128xbf16>
    %c0_1 = arith.constant 0 : index
    %7 = arith.index_cast %4 : i32 to index
    %8 = vector.load %arg3[%c0_1, %7] : memref<8x128xbf16, #tpu.memory_space<vmem>>, vector<8x128xbf16>
    %c0_2 = arith.constant 0 : index
    %c0_3 = arith.constant 0 : index
    %9 = vector.load %arg6[%c0_2, %c0_3] : memref<8x128xf32, #tpu.memory_space<vmem>>, vector<8x128xf32>
    %c0_4 = arith.constant 0 : index
    %c0_5 = arith.constant 0 : index
    %10 = vector.load %arg4[%c0_4, %c0_5] : memref<128x128xbf16, #tpu.memory_space<vmem>>, vector<128x128xbf16>
    %cst = arith.constant dense<0.000000e+00> : vector<8x128xf32>
    %11 = tpu.matmul %6, %10, %cst {dimension_numbers = #tpu.dot_dimension_numbers<[1], [0], [0], [1], [0, 0, 1, 1], [], []>} : vector<8x128xbf16>, vector<128x128xbf16>, vector<8x128xf32> -> vector<8x128xf32>
    %c0_6 = arith.constant 0 : index
    %c0_7 = arith.constant 0 : index
    %12 = vector.load %arg5[%c0_6, %c0_7] : memref<128x128xbf16, #tpu.memory_space<vmem>>, vector<128x128xbf16>
    %cst_8 = arith.constant dense<0.000000e+00> : vector<8x128xf32>
    %13 = tpu.matmul %8, %12, %cst_8 {dimension_numbers = #tpu.dot_dimension_numbers<[1], [0], [0], [1], [0, 0, 1, 1], [], []>} : vector<8x128xbf16>, vector<128x128xbf16>, vector<8x128xf32> -> vector<8x128xf32>
    %14 = arith.addf %11, %13 : vector<8x128xf32>
    %15 = arith.addf %9, %14 : vector<8x128xf32>
    %c0_9 = arith.constant 0 : index
    %c0_10 = arith.constant 0 : index
    %16 = vector.load %arg6[%c0_9, %c0_10] : memref<8x128xf32, #tpu.memory_space<vmem>>, vector<8x128xf32>
    tpu.vector_store %arg6[%c0_9, %c0_10], %15 {strides = array<i32>} : memref<8x128xf32, #tpu.memory_space<vmem>>, vector<8x128xf32>,
    return
  }
  func.func @transform_0(%arg0: i32, %arg1: i32) -> (i32, i32) {
    %c0_i32 = arith.constant 0 : i32
    %c0_i32_0 = arith.constant 0 : i32
    %c0_i32_1 = arith.constant 0 : i32
    return %c0_i32, %c0_i32_0 : i32, i32
  }
  func.func @transform_1(%arg0: i32, %arg1: i32) -> (i32, i32) {
    %c0_i32 = arith.constant 0 : i32
    %c0_i32_0 = arith.constant 0 : i32
    %c0_i32_1 = arith.constant 0 : i32
    return %c0_i32, %c0_i32_0 : i32, i32
  }
  func.func @transform_2(%arg0: i32, %arg1: i32) -> (i32, i32) {
    %c0_i32 = arith.constant 0 : i32
    return %arg1, %arg0 : i32, i32
  }
  func.func @transform_3(%arg0: i32, %arg1: i32) -> (i32, i32) {
    %c0_i32 = arith.constant 0 : i32
    return %arg1, %arg0 : i32, i32
  }
  func.func @transform_4(%arg0: i32, %arg1: i32) -> (i32, i32) {
    %c0_i32 = arith.constant 0 : i32
    %c0_i32_0 = arith.constant 0 : i32
    return %c0_i32, %arg0 : i32, i32
  }
}

</mosaic_0001>

<llo_original>
// kernel: tpu_custom_call.1
$region0: #{tpu_custom_call.1}
  #allocation0 [shape = 'u32[]', space=smem, size = 0x4, offset = 0x4, fixed_abs, tag = 'smem constant byte address 0x4 - core index']
  #allocation1 [shape = 'u32[144,128]{1,0:T(1,128)}', space=vmem, size = 0x12000, scoped, tag = 'internal scratch']
  %s0 = inlined_call_operand.hbm [shape: bf16[8,128], index: 0, kind: input, shape index: {}]
  %s1 = inlined_call_operand.hbm [shape: bf16[8,128], index: 1, kind: input, shape index: {}]
  %s2 = inlined_call_operand.hbm [shape: bf16[128,128], index: 2, kind: input, shape index: {}]
  %s3 = inlined_call_operand.hbm [shape: bf16[128,128], index: 3, kind: input, shape index: {}]
  %s4 = inlined_call_operand.hbm [shape: f32[8,128], index: 4, kind: output, shape index: {}]
  %s5 = sld [smem:[#allocation0]]
  $region46: #{tpu_custom_call.1} parent=0
    _
  %s7 = ssub.s32 1, %s5
  %s8 = scalar_select 0, %s7, %s5
  $region1: #{tpu_custom_call.1} parent=0
    #allocation2 [shape = 'u8[2048]{0}', space=vmem, size = 0x800, scoped, tag = 'input window, operand 0, single buffered']
    #allocation3 [shape = 's32[1]{0}', space=sflag, size = 0x4, scoped, tag = 'scoped memory for tpu_custom_call.1']
    #allocation4 [shape = 's32[1]{0}', space=sflag, size = 0x4, scoped, tag = 'scoped memory for tpu_custom_call.1']
    #allocation5 [shape = 'u8[2048]{0}', space=vmem, size = 0x800, scoped, tag = 'input window, operand 1, single buffered']
    #allocation6 [shape = 's32[1]{0}', space=sflag, size = 0x4, scoped, tag = 'scoped memory for tpu_custom_call.1']
    #allocation7 [shape = 'u8[32768]{0}', space=vmem, size = 0x8000, scoped, tag = 'input window, operand 2, single buffered']
    #allocation8 [shape = 'u8[32768]{0}', space=vmem, size = 0x8000, scoped, tag = 'input window, operand 3, single buffered']
    #allocation9 [shape = 's32[1]{0}', space=sflag, size = 0x4, scoped, tag = 'scoped memory for tpu_custom_call.1']
    #allocation10 [shape = 'u8[4096]{0}', space=vmem, size = 0x1000, scoped, tag = 'output window, operand 0, single buffered']
    %9 = vsyncpa [#allocation3], 0
    %10 = vsyncpa [#allocation6], 0
    %11 = vsyncpa [#allocation9], 0
    %12 = vsyncpa [#allocation4], 0
    // Predicated region
    $region2: #{tpu_custom_call.1} parent=1 // pred_check
      _
    $region3: #{tpu_custom_call.1} parent=1 // pred_check_branch
      %14 = sbr.rel (0) target = $region5
    $region4: #{tpu_custom_call.1} parent=1 // pred_region
      %s16 = ssub.s32 64, 64
      %17 = vsyncadd [#allocation3], %s16
      %s19 = sshll.u32 [#allocation2], 4
      %s20 = int_to_ptr.vmem [resolvable:$true] %s19
      %22 = dma.hbm_to_vmem [thread:$0]  %s0, 64, %s20, [#allocation3]
    $region5: #{tpu_custom_call.1} parent=1 // pred_fallthru
      _
    // Predicated region
    $region6: #{tpu_custom_call.1} parent=1 // pred_check
      _
    $region7: #{tpu_custom_call.1} parent=1 // pred_check_branch
      %24 = sbr.rel (0) target = $region9
    $region8: #{tpu_custom_call.1} parent=1 // pred_region
      %s26 = ssub.s32 64, 64
      %27 = vsyncadd [#allocation6], %s26
      %s29 = sshll.u32 [#allocation5], 4
      %s30 = int_to_ptr.vmem [resolvable:$true] %s29
      %32 = dma.hbm_to_vmem [thread:$0]  %s1, 64, %s30, [#allocation6]
    $region9: #{tpu_custom_call.1} parent=1 // pred_fallthru
      _
    // Predicated region
    $region10: #{tpu_custom_call.1} parent=1 // pred_check
      _
    $region11: #{tpu_custom_call.1} parent=1 // pred_check_branch
      %34 = sbr.rel (0) target = $region13
    $region12: #{tpu_custom_call.1} parent=1 // pred_region
      %s36 = ssub.s32 1024, 1024
      %37 = vsyncadd [#allocation6], %s36
      %s38 = sshll.u32 [#allocation7], 4
      %s39 = int_to_ptr.vmem [resolvable:$true] %s38
      %44 = dma.hbm_to_vmem [thread:$0]  %s2, 1024, %s39, [#allocation6], 64, 64, 4
    $region13: #{tpu_custom_call.1} parent=1 // pred_fallthru
      _
    // Predicated region
    $region14: #{tpu_custom_call.1} parent=1 // pred_check
      _
    $region15: #{tpu_custom_call.1} parent=1 // pred_check_branch
      %46 = sbr.rel (0) target = $region17
    $region16: #{tpu_custom_call.1} parent=1 // pred_region
      %s48 = ssub.s32 1024, 1024
      %49 = vsyncadd [#allocation9], %s48
      %s50 = sshll.u32 [#allocation8], 4
      %s51 = int_to_ptr.vmem [resolvable:$true] %s50
      %56 = dma.hbm_to_vmem [thread:$0]  %s3, 1024, %s51, [#allocation9], 64, 64, 4
    $region17: #{tpu_custom_call.1} parent=1 // pred_fallthru
      _
    // Predicated region
    $region18: #{tpu_custom_call.1} parent=1 // pred_check
      _
    $region19: #{tpu_custom_call.1} parent=1 // pred_check_branch
      %58 = sbr.rel (0) target = $region21
    $region20: #{tpu_custom_call.1} parent=1 // pred_region
      %59 = dma.done [#allocation3], 64
    $region21: #{tpu_custom_call.1} parent=1 // pred_fallthru
      _
    // Predicated region
    $region22: #{tpu_custom_call.1} parent=1 // pred_check
      _
    $region23: #{tpu_custom_call.1} parent=1 // pred_check_branch
      %61 = sbr.rel (0) target = $region25
    $region24: #{tpu_custom_call.1} parent=1 // pred_region
      %62 = dma.done [#allocation6], 64
    $region25: #{tpu_custom_call.1} parent=1 // pred_fallthru
      _
    // Predicated region
    $region26: #{tpu_custom_call.1} parent=1 // pred_check
      _
    $region27: #{tpu_custom_call.1} parent=1 // pred_check_branch
      %64 = sbr.rel (0) target = $region29
    $region28: #{tpu_custom_call.1} parent=1 // pred_region
      %65 = dma.done [#allocation6], 1024
    $region29: #{tpu_custom_call.1} parent=1 // pred_fallthru
      _
    // Predicated region
    $region30: #{tpu_custom_call.1} parent=1 // pred_check
      _
    $region31: #{tpu_custom_call.1} parent=1 // pred_check_branch
      %67 = sbr.rel (0) target = $region33
    $region32: #{tpu_custom_call.1} parent=1 // pred_region
      %68 = dma.done [#allocation9], 1024
    $region33: #{tpu_custom_call.1} parent=1 // pred_fallthru
      _
    %p70 = scmp.eq.s32.totalorder 0, 0
    // Predicated region
    $region34: #{tpu_custom_call.1} parent=1 // pred_check
      %p71 = pneg %p70
    $region35: #{tpu_custom_call.1} parent=1 // pred_check_branch
      %73 = sbr.rel (%p71) target = $region37
    $region36: #{tpu_custom_call.1} parent=1 // pred_region
      %74 = vst [vmem:[#allocation10] sm:$0xff] 0.0
    $region37: #{tpu_custom_call.1} parent=1 // pred_fallthru
      _
    %s75 = smul.u32 0, 128
    %s76 = sshra.s32 %s75, 7
    %s77 = sand.u32 %s75, 127
    %s78 = smul.addr %s76, 4
    %s79 = scalar_lea.vmem [#allocation2], %s78
    %v80 = vld [vmem:[%s79] sm:$0xf]
    %s81 = smul.addr %s76, 4
    %s82 = scalar_lea.vmem [#allocation5], %s81
    %v83 = vld [vmem:[%s82] sm:$0xf]
    %v84 = vld [vmem:[#allocation10] sm:$0xff]
    %v85 = vld [vmem:[#allocation7] sm:$0xf]
    %v86 = vld [vmem:[#allocation7 + $0x4] sm:$0xf]
    %v87 = vld [vmem:[#allocation7 + $0x8] sm:$0xf]
    %v88 = vld [vmem:[#allocation7 + $0xc] sm:$0xf]
    %v89 = vld [vmem:[#allocation7 + $0x10] sm:$0xf]
    %v90 = vld [vmem:[#allocation7 + $0x14] sm:$0xf]
    %v91 = vld [vmem:[#allocation7 + $0x18] sm:$0xf]
    %v92 = vld [vmem:[#allocation7 + $0x1c] sm:$0xf]
    %v93 = vld [vmem:[#allocation7 + $0x20] sm:$0xf]
    %v94 = vld [vmem:[#allocation7 + $0x24] sm:$0xf]
    %v95 = vld [vmem:[#allocation7 + $0x28] sm:$0xf]
    %v96 = vld [vmem:[#allocation7 + $0x2c] sm:$0xf]
    %v97 = vld [vmem:[#allocation7 + $0x30] sm:$0xf]
    %v98 = vld [vmem:[#allocation7 + $0x34] sm:$0xf]
    %v99 = vld [vmem:[#allocation7 + $0x38] sm:$0xf]
    %v100 = vld [vmem:[#allocation7 + $0x3c] sm:$0xf]
    %v101 = vld [vmem:[#allocation8] sm:$0xf]
    %v102 = vld [vmem:[#allocation8 + $0x4] sm:$0xf]
    %v103 = vld [vmem:[#allocation8 + $0x8] sm:$0xf]
    %v104 = vld [vmem:[#allocation8 + $0xc] sm:$0xf]
    %v105 = vld [vmem:[#allocation8 + $0x10] sm:$0xf]
    %v106 = vld [vmem:[#allocation8 + $0x14] sm:$0xf]
    %v107 = vld [vmem:[#allocation8 + $0x18] sm:$0xf]
    %v108 = vld [vmem:[#allocation8 + $0x1c] sm:$0xf]
    %v109 = vld [vmem:[#allocation8 + $0x20] sm:$0xf]
    %v110 = vld [vmem:[#allocation8 + $0x24] sm:$0xf]
    %v111 = vld [vmem:[#allocation8 + $0x28] sm:$0xf]
    %v112 = vld [vmem:[#allocation8 + $0x2c] sm:$0xf]
    %v113 = vld [vmem:[#allocation8 + $0x30] sm:$0xf]
    %v114 = vld [vmem:[#allocation8 + $0x34] sm:$0xf]
    %v115 = vld [vmem:[#allocation8 + $0x38] sm:$0xf]
    %v116 = vld [vmem:[#allocation8 + $0x3c] sm:$0xf]
    %v133 = vunpack.c.l.b16 %v101
    %v134 = vunpack.c.l.b16 %v102
    %v135 = vunpack.c.l.b16 %v103
    %v136 = vunpack.c.l.b16 %v104
    %v137 = vunpack.c.l.b16 %v105
    %v138 = vunpack.c.l.b16 %v106
    %v139 = vunpack.c.l.b16 %v107
    %v140 = vunpack.c.l.b16 %v108
    %v141 = vunpack.c.l.b16 %v109
    %v142 = vunpack.c.l.b16 %v110
    %v143 = vunpack.c.l.b16 %v111
    %v144 = vunpack.c.l.b16 %v112
    %v145 = vunpack.c.l.b16 %v113
    %v146 = vunpack.c.l.b16 %v114
    %v147 = vunpack.c.l.b16 %v115
    %v148 = vunpack.c.l.b16 %v116
    %v149 = vpack.c.b16 %v134, %v133
    %v150 = vpack.c.b16 %v136, %v135
    %v151 = vpack.c.b16 %v138, %v137
    %v152 = vpack.c.b16 %v140, %v139
    %v153 = vpack.c.b16 %v142, %v141
    %v154 = vpack.c.b16 %v144, %v143
    %v155 = vpack.c.b16 %v146, %v145
    %v156 = vpack.c.b16 %v148, %v147
    %165 = vmatprep.subr.bf16.mxu0 0
    %166 = vmatpush1.bf16.msra.mxu0 %v149
    %167 = vmatprep.subr.bf16.mxu0 0
    %168 = vmatpush1.bf16.msra.mxu0 %v150
    %169 = vmatprep.subr.bf16.mxu0 0
    %170 = vmatpush1.bf16.msra.mxu0 %v151
    %171 = vmatprep.subr.bf16.mxu0 0
    %172 = vmatpush1.bf16.msra.mxu0 %v152
    %173 = vmatprep.subr.bf16.mxu0 0
    %174 = vmatpush1.bf16.msra.mxu0 %v153
    %175 = vmatprep.subr.bf16.mxu0 0
    %176 = vmatpush1.bf16.msra.mxu0 %v154
    %177 = vmatprep.subr.bf16.mxu0 0
    %178 = vmatpush1.bf16.msra.mxu0 %v155
    %179 = vmatprep.subr.bf16.mxu0 0
    %180 = vmatpush1.bf16.msra.mxu0 %v156
    %181 = vmatprep.subr.bf16.mxu0 0
    %182 = vmatpush1.bf16.msra.mxu0 0
    %183 = vmatprep.subr.bf16.mxu0 0
    %184 = vmatpush1.bf16.msra.mxu0 0
    %185 = vmatprep.subr.bf16.mxu0 0
    %186 = vmatpush1.bf16.msra.mxu0 0
    %187 = vmatprep.subr.bf16.mxu0 0
    %188 = vmatpush1.bf16.msra.mxu0 0
    %189 = vmatprep.subr.bf16.mxu0 0
    %190 = vmatpush1.bf16.msra.mxu0 0
    %191 = vmatprep.subr.bf16.mxu0 0
    %192 = vmatpush1.bf16.msra.mxu0 0
    %193 = vmatprep.subr.bf16.mxu0 0
    %194 = vmatpush1.bf16.msra.mxu0 0
    %195 = vmatprep.subr.bf16.mxu0 0
    %196 = vmatpush1.bf16.msra.mxu0 0
    %197 = vmatprep.mubr.bf16.mxu0 0
    %198 = vmatmul.mubr.bf16.gmra.mrb[0].mxu0 %v83
    %v199 = vpop.f32.mrb[0].mxu0
    %v200 = vadd.f32 0.0, %v199
    %v201 = vpop.f32.mrb[0].mxu0
    %v202 = vpop.f32.mrb[0].mxu0
    %v203 = vpop.f32.mrb[0].mxu0
    %204 = vdwg.mxu0
    %v221 = vunpack.c.l.b16 %v85
    %v222 = vunpack.c.l.b16 %v86
    %v223 = vunpack.c.l.b16 %v87
    %v224 = vunpack.c.l.b16 %v88
    %v225 = vunpack.c.l.b16 %v89
    %v226 = vunpack.c.l.b16 %v90
    %v227 = vunpack.c.l.b16 %v91
    %v228 = vunpack.c.l.b16 %v92
    %v229 = vunpack.c.l.b16 %v93
    %v230 = vunpack.c.l.b16 %v94
    %v231 = vunpack.c.l.b16 %v95
    %v232 = vunpack.c.l.b16 %v96
    %v233 = vunpack.c.l.b16 %v97
    %v234 = vunpack.c.l.b16 %v98
    %v235 = vunpack.c.l.b16 %v99
    %v236 = vunpack.c.l.b16 %v100
    %v237 = vpack.c.b16 %v222, %v221
    %v238 = vpack.c.b16 %v224, %v223
    %v239 = vpack.c.b16 %v226, %v225
    %v240 = vpack.c.b16 %v228, %v227
    %v241 = vpack.c.b16 %v230, %v229
    %v242 = vpack.c.b16 %v232, %v231
    %v243 = vpack.c.b16 %v234, %v233
    %v244 = vpack.c.b16 %v236, %v235
    %253 = vmatprep.subr.bf16.mxu0 0
    %254 = vmatpush1.bf16.msra.mxu0 %v237
    %255 = vmatprep.subr.bf16.mxu0 0
    %256 = vmatpush1.bf16.msra.mxu0 %v238
    %257 = vmatprep.subr.bf16.mxu0 0
    %258 = vmatpush1.bf16.msra.mxu0 %v239
    %259 = vmatprep.subr.bf16.mxu0 0
    %260 = vmatpush1.bf16.msra.mxu0 %v240
    %261 = vmatprep.subr.bf16.mxu0 0
    %262 = vmatpush1.bf16.msra.mxu0 %v241
    %263 = vmatprep.subr.bf16.mxu0 0
    %264 = vmatpush1.bf16.msra.mxu0 %v242
    %265 = vmatprep.subr.bf16.mxu0 0
    %266 = vmatpush1.bf16.msra.mxu0 %v243
    %267 = vmatprep.subr.bf16.mxu0 0
    %268 = vmatpush1.bf16.msra.mxu0 %v244
    %269 = vmatprep.subr.bf16.mxu0 0
    %270 = vmatpush1.bf16.msra.mxu0 0
    %271 = vmatprep.subr.bf16.mxu0 0
    %272 = vmatpush1.bf16.msra.mxu0 0
    %273 = vmatprep.subr.bf16.mxu0 0
    %274 = vmatpush1.bf16.msra.mxu0 0
    %275 = vmatprep.subr.bf16.mxu0 0
    %276 = vmatpush1.bf16.msra.mxu0 0
    %277 = vmatprep.subr.bf16.mxu0 0
    %278 = vmatpush1.bf16.msra.mxu0 0
    %279 = vmatprep.subr.bf16.mxu0 0
    %280 = vmatpush1.bf16.msra.mxu0 0
    %281 = vmatprep.subr.bf16.mxu0 0
    %282 = vmatpush1.bf16.msra.mxu0 0
    %283 = vmatprep.subr.bf16.mxu0 0
    %284 = vmatpush1.bf16.msra.mxu0 0
    %285 = vmatprep.mubr.bf16.mxu0 0
    %286 = vmatmul.mubr.bf16.gmra.mrb[0].mxu0 %v80
    %v287 = vpop.f32.mrb[0].mxu0
    %v288 = vadd.f32 %v200, %v287
    %v289 = vpop.f32.mrb[0].mxu0
    %v290 = vpop.f32.mrb[0].mxu0
    %v291 = vpop.f32.mrb[0].mxu0
    %292 = vdwg.mxu0
    %v293 = vadd.f32 %v84, %v288
    %294 = vst [vmem:[#allocation10] sm:$0xff] %v293
    // Predicated region
    $region38: #{tpu_custom_call.1} parent=1 // pred_check
      _
    $region39: #{tpu_custom_call.1} parent=1 // pred_check_branch
      %296 = sbr.rel (0) target = $region41
    $region40: #{tpu_custom_call.1} parent=1 // pred_region
      %s298 = ssub.s32 128, 128
      %299 = vsyncadd [#allocation4], %s298
      %s301 = sshll.u32 [#allocation10], 4
      %s302 = int_to_ptr.vmem [resolvable:$true] %s301
      %304 = dma.vmem_to_hbm [thread:$0]  %s302, 128, %s4, [#allocation4]
    $region41: #{tpu_custom_call.1} parent=1 // pred_fallthru
      _
    // Predicated region
    $region42: #{tpu_custom_call.1} parent=1 // pred_check
      _
    $region43: #{tpu_custom_call.1} parent=1 // pred_check_branch
      %306 = sbr.rel (0) target = $region45
    $region44: #{tpu_custom_call.1} parent=1 // pred_region
      %307 = dma.done [#allocation4], 128
    $region45: #{tpu_custom_call.1} parent=1 // pred_fallthru
      _
    %308 = vsyncpa [#allocation3], 1
    %309 = vsyncpa [#allocation6], 1
    %310 = vsyncpa [#allocation9], 1
    %311 = vsyncpa [#allocation4], 1

</llo_original>
